<compile_context>
chip_gen: v5e
topology: v5e:2x2
jax: 0.10.0
libtpu: 0.0.40
codegen_flags: <defaults>
</compile_context>

<pallas_src>
import numpy as np

import jax
import jax.numpy as jnp
from jax.experimental import pallas as pl
from jax.experimental.pallas import tpu as pltpu


# ---------------------------------------------------------------------------
# Fused kernel:
#   NER head        : ner_logits[s] = sum_h emb[s, h] * w[h] + b
#                     pred[s]       = ner_logits[s] > 0     (== sigmoid > 0.5, exact)
#   Sentiment score : probs = softmax(sent_logits, axis=1)
#                     score[n] = 100*(probs[n,0] - probs[n,1])
#   Per-crypto avg  : impact[k] = round_half_even(mean_{n: mask[n,k]=1} score[n], 1)
#                     (0 if a crypto has no mentions)
# ---------------------------------------------------------------------------
def crypto_impact_kernel(emb_ref, w_ref, b_ref, sent_logits_ref, mask_ref,
                         pred_ref, impact_ref):
    # ---- NER token-classification head (no MXU, no transposes) -------------
    # emb is (S, H) in the encoder-native layout; bf16 in, f32 accumulate.
    emb = emb_ref[...].astype(jnp.float32)                  # (S, H)
    w = w_ref[...].astype(jnp.float32)                      # (1, H) row
    b = b_ref[0]                                            # scalar from 1-D SMEM
    # VPU multiply + cross-lane (XLU) reduce over H; XLU slot is otherwise idle.
    ner_logits = jnp.sum(emb * w, axis=1, keepdims=True) + b        # (S, 1)
    # sigmoid(x) > 0.5  <=>  x > 0  (exact; no EUP transcendental needed)
    pred_ref[...] = (ner_logits > 0.0).astype(jnp.float32)          # (S, 1)

    # ---- Sentiment softmax (exact) + per-crypto masked average -------------
    sl = sent_logits_ref[...]                               # (N, C)
    m = jnp.max(sl, axis=1, keepdims=True)                  # (N, 1)
    e = jnp.exp(sl - m)
    probs = e / jnp.sum(e, axis=1, keepdims=True)           # exact f32 divide
    score = (probs[:, 0:1] - probs[:, 1:2]) * 100.0         # (N, 1) column

    mask = mask_ref[...]                                    # (N, K), K on lanes
    num = jnp.sum(mask * score, axis=0, keepdims=True)      # (1, K)
    cnt = jnp.sum(mask, axis=0, keepdims=True)              # (1, K)
    avg = jnp.where(cnt > 0.0, num / jnp.maximum(cnt, 1.0), 0.0)

    # round(avg, 1) with half-to-EVEN ties (matches Python round / torch),
    # built only from floor/compare/select — guaranteed VPU lowering.
    s10 = avg * 10.0
    f = jnp.floor(s10)
    frac = s10 - f
    f_is_even = (f - jnp.floor(f * 0.5) * 2.0) == 0.0
    rounded = jnp.where(frac > 0.5, f + 1.0,
              jnp.where(frac < 0.5, f,
              jnp.where(f_is_even, f, f + 1.0)))
    impact_ref[...] = rounded * 0.1                         # (1, K), lane-dense


def crypto_impact_heads(emb, ner_w, ner_b, sent_logits, mention_mask):
    S, H = emb.shape
    N, K = mention_mask.shape
    C = sent_logits.shape[1]

    in_bytes = (emb.size * emb.dtype.itemsize
                + ner_w.size * ner_w.dtype.itemsize
                + ner_b.size * ner_b.dtype.itemsize
                + sent_logits.size * sent_logits.dtype.itemsize
                + mention_mask.size * mention_mask.dtype.itemsize)
    out_bytes = 4 * S + 4 * K
    cost = pl.CostEstimate(
        flops=2 * S * H + 8 * N * C + 4 * N * K,
        transcendentals=N * C,                    # exp in the softmax
        bytes_accessed=in_bytes + out_bytes,
    )

    return pl.pallas_call(
        crypto_impact_kernel,
        out_shape=(
            jax.ShapeDtypeStruct((S, 1), jnp.float32),   # predictions (per token)
            jax.ShapeDtypeStruct((1, K), jnp.float32),   # impacts (lane-dense)
        ),
        in_specs=[
            pl.BlockSpec(memory_space=pltpu.MemorySpace.VMEM),   # emb         (S, H) bf16
            pl.BlockSpec(memory_space=pltpu.MemorySpace.VMEM),   # ner_w       (1, H) bf16
            pl.BlockSpec(memory_space=pltpu.MemorySpace.SMEM),   # ner_b       (1,) f32 scalar
            pl.BlockSpec(memory_space=pltpu.MemorySpace.VMEM),   # sent_logits (N, C)
            pl.BlockSpec(memory_space=pltpu.MemorySpace.VMEM),   # mention_mask(N, K)
        ],
        out_specs=(
            pl.BlockSpec(memory_space=pltpu.MemorySpace.VMEM),
            pl.BlockSpec(memory_space=pltpu.MemorySpace.VMEM),
        ),
        cost_estimate=cost,
    )(emb, ner_w, ner_b, sent_logits, mention_mask)


# ---------------------------------------------------------------------------
# Forward wrapper (glue in plain JAX / Python)
# ---------------------------------------------------------------------------
def crypto_impact_forward(embeddings, ner_w, ner_b, sent_logits, mention_mask):
    # TODO(synk): BERT NER encoder + tokenizer (embeddings stand in for
    # ner_model(...).last_hidden_state with batch=1 squeezed to (S, H); the
    # encoder should emit bf16 so no extra cast HBM round trip is needed).
    #
    # TODO(synk): token->entity string matching against the CoinGecko crypto
    # list and the per-sentence regex matching in analyze_sentiment() are pure
    # Python string processing; mention_mask (sentences x cryptos) stands in
    # for their result, sent_logits for sentiment_model(...).logits.
    predictions, impacts = crypto_impact_heads(
        embeddings, ner_w, ner_b, sent_logits, mention_mask)
    # predictions: (S, 1) float 0/1 per token — same content as torch's
    # sigmoid(logits).squeeze(-1) > 0.5 for batch=1 (bool -> f32, column layout).
    return predictions, impacts


def impacts_to_dict(impacts, crypto_names):
    # Single host transfer for the whole impacts row, then build the dict on
    # host (avoids K separate tiny device->host round trips).
    impacts_np = np.asarray(jax.device_get(impacts))
    return {name: float(impacts_np[0, k]) for k, name in enumerate(crypto_names)}


if __name__ == "__main__":
    key = jax.random.PRNGKey(0)
    k_emb, k_w, k_b, k_logits = jax.random.split(key, 4)

    S, H = 8, 32        # seq length, NER hidden size (small stand-in for 512/768)
    N, C = 4, 3         # number of candidate sentences, sentiment classes
    K = 2               # number of detected cryptocurrencies

    # Stand-in for ner_model(...).last_hidden_state (batch=1, squeezed), bf16.
    embeddings = jax.random.normal(k_emb, (S, H), dtype=jnp.float32).astype(jnp.bfloat16)
    # nn.Linear(hidden_size, 1) parameters: weight as its natural (1, H) row, bf16.
    ner_w = (jax.random.normal(k_w, (1, H), dtype=jnp.float32) * 0.02).astype(jnp.bfloat16)
    ner_b = (jax.random.normal(k_b, (1,), dtype=jnp.float32) * 0.02)
    # Stand-in for sentiment_model(...).logits per candidate sentence.
    sent_logits = jax.random.normal(k_logits, (N, C), dtype=jnp.float32)
    # mention_mask[n, k] = 1 if sentence n regex-matches crypto k.
    mention_mask = jnp.array([[1.0, 0.0],
                              [0.0, 1.0],
                              [1.0, 0.0],
                              [0.0, 0.0]], dtype=jnp.float32)
    crypto_names = ["bitcoin", "ethereum"]

    preds, impacts = crypto_impact_forward(
        embeddings, ner_w, ner_b, sent_logits, mention_mask)

    preds = jax.block_until_ready(preds)
    impacts = jax.block_until_ready(impacts)
    result = impacts_to_dict(impacts, crypto_names)   # one host transfer

    print("KERNEL_OK")
</pallas_src>

<mosaic_0001>
module attributes {stable_mosaic.version = 11 : i64} {
  func.func @crypto_impact_kernel(%arg0: memref<8x32xbf16, #tpu.memory_space<vmem>>, %arg1: memref<1x32xbf16, #tpu.memory_space<vmem>>, %arg2: memref<1xf32, #tpu.memory_space<smem>>, %arg3: memref<4x3xf32, #tpu.memory_space<vmem>>, %arg4: memref<4x2xf32, #tpu.memory_space<vmem>>, %arg5: memref<8x1xf32, #tpu.memory_space<vmem>>, %arg6: memref<1x2xf32, #tpu.memory_space<vmem>>) attributes {dimension_semantics = [], scalar_prefetch = 0 : i64, scratch_operands = 0 : i64, tpu.core_type = #tpu.core_type<tc>} {
    %c0 = arith.constant 0 : index
    %c0_0 = arith.constant 0 : index
    %0 = vector.load %arg0[%c0, %c0_0] : memref<8x32xbf16, #tpu.memory_space<vmem>>, vector<8x32xbf16>
    %1 = arith.extf %0 : vector<8x32xbf16> to vector<8x32xf32>
    %c0_1 = arith.constant 0 : index
    %c0_2 = arith.constant 0 : index
    %2 = vector.load %arg1[%c0_1, %c0_2] : memref<1x32xbf16, #tpu.memory_space<vmem>>, vector<1x32xbf16>
    %3 = arith.extf %2 : vector<1x32xbf16> to vector<1x32xf32>
    %c0_3 = arith.constant 0 : index
    %4 = memref.load %arg2[%c0_3] : memref<1xf32, #tpu.memory_space<smem>>
    %5 = vector.broadcast %3 : vector<1x32xf32> to vector<8x32xf32>
    %6 = arith.mulf %1, %5 : vector<8x32xf32>
    %cst = arith.constant dense<0.000000e+00> : vector<8xf32>
    %7 = vector.multi_reduction <add>, %6, %cst [1] : vector<8x32xf32> to vector<8xf32>
    %8 = vector.shape_cast %7 : vector<8xf32> to vector<8x1xf32>
    %9 = vector.broadcast %4 : f32 to vector<8x1xf32>
    %10 = arith.addf %8, %9 : vector<8x1xf32>
    %cst_4 = arith.constant 0.000000e+00 : f32
    %11 = vector.broadcast %cst_4 : f32 to vector<8x1xf32>
    %12 = arith.cmpf ogt, %10, %11 : vector<8x1xf32>
    %13 = arith.extui %12 : vector<8x1xi1> to vector<8x1xi32>
    %14 = arith.sitofp %13 : vector<8x1xi32> to vector<8x1xf32>
    %c0_5 = arith.constant 0 : index
    %c0_6 = arith.constant 0 : index
    %15 = vector.load %arg5[%c0_5, %c0_6] : memref<8x1xf32, #tpu.memory_space<vmem>>, vector<8x1xf32>
    tpu.vector_store %arg5[%c0_5, %c0_6], %14 {strides = array<i32>} : memref<8x1xf32, #tpu.memory_space<vmem>>, vector<8x1xf32>,
    %c0_7 = arith.constant 0 : index
    %c0_8 = arith.constant 0 : index
    %16 = vector.load %arg3[%c0_7, %c0_8] : memref<4x3xf32, #tpu.memory_space<vmem>>, vector<4x3xf32>
    %cst_9 = arith.constant dense<0xFF800000> : vector<4xf32>
    %17 = vector.multi_reduction <maximumf>, %16, %cst_9 [1] : vector<4x3xf32> to vector<4xf32>
    %18 = vector.shape_cast %17 : vector<4xf32> to vector<4x1xf32>
    %19 = vector.broadcast %18 : vector<4x1xf32> to vector<4x3xf32>
    %20 = arith.subf %16, %19 : vector<4x3xf32>
    %21 = math.exp %20 : vector<4x3xf32>
    %cst_10 = arith.constant dense<0.000000e+00> : vector<4xf32>
    %22 = vector.multi_reduction <add>, %21, %cst_10 [1] : vector<4x3xf32> to vector<4xf32>
    %23 = vector.shape_cast %22 : vector<4xf32> to vector<4x1xf32>
    %24 = vector.broadcast %23 : vector<4x1xf32> to vector<4x3xf32>
    %25 = arith.divf %21, %24 : vector<4x3xf32>
    %26 = vector.extract_strided_slice %25 {offsets = [0, 0], sizes = [4, 1], strides = [1, 1]} : vector<4x3xf32> to vector<4x1xf32>
    %27 = vector.extract_strided_slice %25 {offsets = [0, 1], sizes = [4, 1], strides = [1, 1]} : vector<4x3xf32> to vector<4x1xf32>
    %28 = arith.subf %26, %27 : vector<4x1xf32>
    %cst_11 = arith.constant 1.000000e+02 : f32
    %29 = vector.broadcast %cst_11 : f32 to vector<4x1xf32>
    %30 = arith.mulf %28, %29 : vector<4x1xf32>
    %c0_12 = arith.constant 0 : index
    %c0_13 = arith.constant 0 : index
    %31 = vector.load %arg4[%c0_12, %c0_13] : memref<4x2xf32, #tpu.memory_space<vmem>>, vector<4x2xf32>
    %32 = vector.broadcast %30 : vector<4x1xf32> to vector<4x2xf32>
    %33 = arith.mulf %31, %32 : vector<4x2xf32>
    %cst_14 = arith.constant dense<0.000000e+00> : vector<2xf32>
    %34 = vector.multi_reduction <add>, %33, %cst_14 [0] : vector<4x2xf32> to vector<2xf32>
    %35 = vector.shape_cast %34 : vector<2xf32> to vector<1x2xf32>
    %cst_15 = arith.constant dense<0.000000e+00> : vector<2xf32>
    %36 = vector.multi_reduction <add>, %31, %cst_15 [0] : vector<4x2xf32> to vector<2xf32>
    %37 = vector.shape_cast %36 : vector<2xf32> to vector<1x2xf32>
    %cst_16 = arith.constant 0.000000e+00 : f32
    %38 = vector.broadcast %cst_16 : f32 to vector<1x2xf32>
    %39 = arith.cmpf ogt, %37, %38 : vector<1x2xf32>
    %cst_17 = arith.constant 1.000000e+00 : f32
    %40 = vector.broadcast %cst_17 : f32 to vector<1x2xf32>
    %41 = arith.maximumf %37, %40 : vector<1x2xf32>
    %42 = arith.divf %35, %41 : vector<1x2xf32>
    %cst_18 = arith.constant 0.000000e+00 : f32
    %43 = vector.broadcast %cst_18 : f32 to vector<1x2xf32>
    %44 = arith.select %39, %42, %43 : vector<1x2xi1>, vector<1x2xf32>
    %cst_19 = arith.constant 1.000000e+01 : f32
    %45 = vector.broadcast %cst_19 : f32 to vector<1x2xf32>
    %46 = arith.mulf %44, %45 : vector<1x2xf32>
    %47 = math.floor %46 : vector<1x2xf32>
    %48 = arith.subf %46, %47 : vector<1x2xf32>
    %cst_20 = arith.constant 5.000000e-01 : f32
    %49 = vector.broadcast %cst_20 : f32 to vector<1x2xf32>
    %50 = arith.mulf %47, %49 : vector<1x2xf32>
    %51 = math.floor %50 : vector<1x2xf32>
    %cst_21 = arith.constant 2.000000e+00 : f32
    %52 = vector.broadcast %cst_21 : f32 to vector<1x2xf32>
    %53 = arith.mulf %51, %52 : vector<1x2xf32>
    %54 = arith.subf %47, %53 : vector<1x2xf32>
    %cst_22 = arith.constant 0.000000e+00 : f32
    %55 = vector.broadcast %cst_22 : f32 to vector<1x2xf32>
    %56 = arith.cmpf oeq, %54, %55 : vector<1x2xf32>
    %cst_23 = arith.constant 5.000000e-01 : f32
    %57 = vector.broadcast %cst_23 : f32 to vector<1x2xf32>
    %58 = arith.cmpf ogt, %48, %57 : vector<1x2xf32>
    %cst_24 = arith.constant 1.000000e+00 : f32
    %59 = vector.broadcast %cst_24 : f32 to vector<1x2xf32>
    %60 = arith.addf %47, %59 : vector<1x2xf32>
    %cst_25 = arith.constant 5.000000e-01 : f32
    %61 = vector.broadcast %cst_25 : f32 to vector<1x2xf32>
    %62 = arith.cmpf olt, %48, %61 : vector<1x2xf32>
    %cst_26 = arith.constant 1.000000e+00 : f32
    %63 = vector.broadcast %cst_26 : f32 to vector<1x2xf32>
    %64 = arith.addf %47, %63 : vector<1x2xf32>
    %65 = arith.select %56, %47, %64 : vector<1x2xi1>, vector<1x2xf32>
    %66 = arith.select %62, %47, %65 : vector<1x2xi1>, vector<1x2xf32>
    %67 = arith.select %58, %60, %66 : vector<1x2xi1>, vector<1x2xf32>
    %cst_27 = arith.constant 1.000000e-01 : f32
    %68 = vector.broadcast %cst_27 : f32 to vector<1x2xf32>
    %69 = arith.mulf %67, %68 : vector<1x2xf32>
    %c0_28 = arith.constant 0 : index
    %c0_29 = arith.constant 0 : index
    %70 = vector.load %arg6[%c0_28, %c0_29] : memref<1x2xf32, #tpu.memory_space<vmem>>, vector<1x2xf32>
    tpu.vector_store %arg6[%c0_28, %c0_29], %69 {strides = array<i32>} : memref<1x2xf32, #tpu.memory_space<vmem>>, vector<1x2xf32>,
    return
  }
}

</mosaic_0001>

<llo_original>
// kernel: tpu_custom_call.1
$region0: #{tpu_custom_call.1}
  #allocation0 [shape = 'u32[]', space=smem, size = 0x4, offset = 0x4, fixed_abs, tag = 'smem constant byte address 0x4 - core index']
  #allocation1 [shape = 'u32[72,128]{1,0:T(1,128)}', space=vmem, size = 0x9000, scoped, tag = 'internal scratch']
  #allocation2 [shape = 'f32[1]{0:T(128)S(6)}', space=smem, size = 0x200, scoped, tag = 'scoped memory for tpu_custom_call.1']
  %s0 = inlined_call_operand.vmem [shape: bf16[8,32], index: 0, kind: input, shape index: {}]
  %s1 = inlined_call_operand.hbm [shape: bf16[1,32], index: 1, kind: input, shape index: {}]
  %s2 = inlined_call_operand.<no memory space> [shape: f32[1], index: 2, kind: input, shape index: {}]
  %s3 = inlined_call_operand.vmem [shape: f32[4,3], index: 3, kind: input, shape index: {}]
  %s4 = inlined_call_operand.vmem [shape: f32[4,2], index: 4, kind: input, shape index: {}]
  %s5 = inlined_call_operand.vmem [shape: f32[8,1], index: 5, kind: output, shape index: {0}]
  %s6 = inlined_call_operand.hbm [shape: f32[1,2], index: 6, kind: output, shape index: {1}]
  %7 = xla_tuple %s5, %s6
  %s8 = sld [smem:[#allocation0]]
  $region42: #{tpu_custom_call.1} parent=0
    _
  %s10 = ssub.s32 1, %s8
  %s11 = scalar_select 0, %s10, %s8
  %12 = sst [smem:[#allocation2]] %s2
  $region1: #{tpu_custom_call.1} parent=0
    #allocation3 [shape = 'u8[512]{0}', space=vmem, size = 0x400, scoped, tag = 'input window, operand 1, single buffered']
    #allocation4 [shape = 's32[1]{0}', space=sflag, size = 0x4, scoped, tag = 'scoped memory for tpu_custom_call.1']
    #allocation5 [shape = 's32[1]{0}', space=sflag, size = 0x4, scoped, tag = 'scoped memory for tpu_custom_call.1']
    #allocation6 [shape = 'u8[512]{0}', space=vmem, size = 0x400, scoped, tag = 'output window, operand 1, single buffered']
    %13 = vsyncpa [#allocation4], 0
    %14 = vsyncpa [#allocation5], 0
    // Predicated region
    $region2: #{tpu_custom_call.1} parent=1 // pred_check
      _
    $region3: #{tpu_custom_call.1} parent=1 // pred_check_branch
      %16 = sbr.rel (0) target = $region5
    $region4: #{tpu_custom_call.1} parent=1 // pred_region
      _
    $region5: #{tpu_custom_call.1} parent=1 // pred_fallthru
      _
    // Predicated region
    $region6: #{tpu_custom_call.1} parent=1 // pred_check
      _
    $region7: #{tpu_custom_call.1} parent=1 // pred_check_branch
      %18 = sbr.rel (0) target = $region9
    $region8: #{tpu_custom_call.1} parent=1 // pred_region
      %20 = vsyncadd [#allocation4], 0
      %s22 = sshll.u32 %s1, 4
      %s23 = int_to_ptr.hbm [resolvable:$true] %s22
      %s24 = sshll.u32 [#allocation3], 4
      %s25 = int_to_ptr.vmem [resolvable:$true] %s24
      %27 = dma.hbm_to_vmem [thread:$0]  %s23, 16, %s25, [#allocation4]
    $region9: #{tpu_custom_call.1} parent=1 // pred_fallthru
      _
    // Predicated region
    $region10: #{tpu_custom_call.1} parent=1 // pred_check
      _
    $region11: #{tpu_custom_call.1} parent=1 // pred_check_branch
      %29 = sbr.rel (0) target = $region13
    $region12: #{tpu_custom_call.1} parent=1 // pred_region
      _
    $region13: #{tpu_custom_call.1} parent=1 // pred_fallthru
      _
    // Predicated region
    $region14: #{tpu_custom_call.1} parent=1 // pred_check
      _
    $region15: #{tpu_custom_call.1} parent=1 // pred_check_branch
      %31 = sbr.rel (0) target = $region17
    $region16: #{tpu_custom_call.1} parent=1 // pred_region
      _
    $region17: #{tpu_custom_call.1} parent=1 // pred_fallthru
      _
    // Predicated region
    $region18: #{tpu_custom_call.1} parent=1 // pred_check
      _
    $region19: #{tpu_custom_call.1} parent=1 // pred_check_branch
      %33 = sbr.rel (0) target = $region21
    $region20: #{tpu_custom_call.1} parent=1 // pred_region
      _
    $region21: #{tpu_custom_call.1} parent=1 // pred_fallthru
      _
    // Predicated region
    $region22: #{tpu_custom_call.1} parent=1 // pred_check
      _
    $region23: #{tpu_custom_call.1} parent=1 // pred_check_branch
      %35 = sbr.rel (0) target = $region25
    $region24: #{tpu_custom_call.1} parent=1 // pred_region
      %37 = dma.done [#allocation4], 16
    $region25: #{tpu_custom_call.1} parent=1 // pred_fallthru
      _
    %v38 = vld [vmem:[%s0] sm:$0xf]
    %v39 = vunpack.c.l.bf16 %v38
    %v40 = vld [vmem:[#allocation3] sm:$0x1]
    %v41 = vunpack.c.l.bf16 %v40
    %s42 = sld [smem:[#allocation2]]
    %v43 = vperm.slane %v41, 0
    %v44 = vmul.f32 %v39, %v43
    %vm45 = vcmask 261120
    %v46 = vsel %vm45, %v44, 0.0
    %47 = vadd.xlane.f32.xlu0 %v46
    %v48 = vpop.xlane.xlu0 %47
    %v49 = vstv %s42
    %v50 = vadd.f32 %v48, %v49
    %vm51 = vcmp.gt.f32.partialorder %v50, 0.0
    %v52 = vsel %vm51, 1, 0
    %v53 = vcvt.s32.f32 %v52
    %vm54 = vcmask 7168
    %55 = vst.msk [vmem:[%s5] sm:$0xff] %vm54, %v53
    %v56 = vld [vmem:[%s3] sm:$0xf]
    %vm57 = vcmask 19456
    %v58 = vsel %vm57, %v56, -inf
    %59 = vmax.xlane.f32.xlu0 %v58
    %v60 = vpop.xlane.xlu0 %59
    %v61 = vsub.f32 %v56, %v60
    %v62 = vmul.f32 %v61, 1.442695
    %v63 = vpow.pop %v62
    %v64 = vsel %vm57, %v63, 0.0
    %65 = vadd.xlane.f32.xlu0 %v64
    %v66 = vpop.xlane.xlu0 %65
    %v67 = vrcp.pop %v66
    %v68 = vmul.f32 %v66, %v67
    %v69 = vsub.f32 1.0, %v68
    %v70 = vmul.f32 %v67, %v69
    %v71 = vadd.f32 %v67, %v70
    %vm72 = vweird.f32 %v66
    %vm73 = vweird.f32 %v67
    %vm74 = vmor %vm72, %vm73
    %v75 = vsel %vm74, %v67, %v71
    %v76 = vand.u32 2147483647, %v66
    %vm77 = vcmp.eq.f32.partialorder %v76, 8.507059e+37
    %v78 = vand.u32 %v66, 2147483648
    %v79 = vor.u32 1.1754944e-38, %v78
    %v80 = vsel %vm77, %v79, %v75
    %v81 = vmul.f32 %v63, %v80
    %83 = vrot.lane.b32.xlu0 %v81, 127
    %v84 = vpop.permute.xlu0 %83
    %v86 = vsub.f32 %v81, %v84
    %v87 = vmul.f32 %v86, 100.0
    %v88 = vld [vmem:[%s4] sm:$0xf]
    %90 = vset.pattern.permute.xlu0 0
    %91 = vperm.xlu0 %90, %v87
    %v92 = vpop.permute.xlu0 %91
    %v94 = vmul.f32 %v88, %v92
    %vm95 = vcmask 11264
    %v96 = vsel %vm95, %v94, 0.0
    %v97 = vrot.slane %v96, 4
    %v98 = vadd.f32 %v96, %v97
    %v99 = vrot.slane %v98, 2
    %v100 = vadd.f32 %v98, %v99
    %v101 = vrot.slane %v100, 1
    %v102 = vadd.f32 %v100, %v101
    %v103 = vsel %vm95, %v88, 0.0
    %v104 = vrot.slane %v103, 4
    %v105 = vadd.f32 %v103, %v104
    %v106 = vrot.slane %v105, 2
    %v107 = vadd.f32 %v105, %v106
    %v108 = vrot.slane %v107, 1
    %v109 = vadd.f32 %v107, %v108
    %vm110 = vcmp.gt.f32.partialorder %v109, 0.0
    %v111 = vmax.f32 %v109, 1.0
    %v112 = vrcp.pop %v111
    %v113 = vmul.f32 %v111, %v112
    %v114 = vsub.f32 1.0, %v113
    %v115 = vmul.f32 %v112, %v114
    %v116 = vadd.f32 %v112, %v115
    %vm117 = vweird.f32 %v111
    %vm118 = vweird.f32 %v112
    %vm119 = vmor %vm117, %vm118
    %v120 = vsel %vm119, %v112, %v116
    %v121 = vand.u32 2147483647, %v111
    %vm122 = vcmp.eq.f32.partialorder %v121, 8.507059e+37
    %v123 = vand.u32 %v111, 2147483648
    %v124 = vor.u32 1.1754944e-38, %v123
    %v125 = vsel %vm122, %v124, %v120
    %v126 = vmul.f32 %v102, %v125
    %v127 = vsel %vm110, %v126, 0.0
    %v128 = vmul.f32 %v127, 10.0
    %v129 = vfloor.f32 %v128
    %v130 = vsub.f32 %v128, %v129
    %v131 = vmul.f32 %v129, 0.5
    %v132 = vfloor.f32 %v131
    %v133 = vmul.f32 %v132, 2.0
    %v134 = vsub.f32 %v129, %v133
    %vm135 = vcmp.eq.f32.partialorder %v134, 0.0
    %vm136 = vcmp.gt.f32.partialorder %v130, 0.5
    %v137 = vadd.f32 %v129, 1.0
    %vm138 = vcmp.lt.f32.partialorder %v130, 0.5
    %v139 = vsel %vm135, %v129, %v137
    %v140 = vsel %vm138, %v129, %v139
    %v141 = vsel %vm136, %v137, %v140
    %v142 = vmul.f32 %v141, 0.1
    %vm143 = vcmask 8192
    %144 = vst.msk [vmem:[#allocation6] sm:$0x1] %vm143, %v142
    // Predicated region
    $region26: #{tpu_custom_call.1} parent=1 // pred_check
      _
    $region27: #{tpu_custom_call.1} parent=1 // pred_check_branch
      %146 = sbr.rel (0) target = $region29
    $region28: #{tpu_custom_call.1} parent=1 // pred_region
      _
    $region29: #{tpu_custom_call.1} parent=1 // pred_fallthru
      _
    // Predicated region
    $region30: #{tpu_custom_call.1} parent=1 // pred_check
      _
    $region31: #{tpu_custom_call.1} parent=1 // pred_check_branch
      %148 = sbr.rel (0) target = $region33
    $region32: #{tpu_custom_call.1} parent=1 // pred_region
      %150 = vsyncadd [#allocation5], 0
      %s152 = sshll.u32 [#allocation6], 4
      %s153 = int_to_ptr.vmem [resolvable:$true] %s152
      %s154 = sshll.u32 %s6, 4
      %s155 = int_to_ptr.hbm [resolvable:$true] %s154
      %157 = dma.vmem_to_hbm [thread:$0]  %s153, 16, %s155, [#allocation5]
    $region33: #{tpu_custom_call.1} parent=1 // pred_fallthru
      _
    // Predicated region
    $region34: #{tpu_custom_call.1} parent=1 // pred_check
      _
    $region35: #{tpu_custom_call.1} parent=1 // pred_check_branch
      %159 = sbr.rel (0) target = $region37
    $region36: #{tpu_custom_call.1} parent=1 // pred_region
      _
    $region37: #{tpu_custom_call.1} parent=1 // pred_fallthru
      _
    // Predicated region
    $region38: #{tpu_custom_call.1} parent=1 // pred_check
      _
    $region39: #{tpu_custom_call.1} parent=1 // pred_check_branch
      %161 = sbr.rel (0) target = $region41
    $region40: #{tpu_custom_call.1} parent=1 // pred_region
      %163 = dma.done [#allocation5], 16
    $region41: #{tpu_custom_call.1} parent=1 // pred_fallthru
      _
    %164 = vsyncpa [#allocation4], 1
    %165 = vsyncpa [#allocation5], 1

</llo_original>
